<compile_context>
chip_gen: v7x
topology: tpu7x:2x2x1
jax: 0.10.0
libtpu: 0.0.40
codegen_flags: <defaults>
</compile_context>

<pallas_src>
import functools

import jax
import jax.numpy as jnp
from jax.experimental import pallas as pl
from jax.experimental.pallas import tpu as pltpu


def _round_up(x: int, m: int) -> int:
    return ((x + m - 1) // m) * m


def _cdiv(a: int, b: int) -> int:
    return -(-a // b)


def qnet_kernel(x_ref, w1_ref, b1_ref, w2_ref, b2_ref, out_ref):
    # Hidden layer: (tb, S) f32 @ (S, 64) f32 -> f32 acc, +bias, ReLU.
    h = jnp.dot(x_ref[...], w1_ref[...], preferred_element_type=jnp.float32)
    h = jnp.maximum(h + b1_ref[...], 0.0)                    # (tb, 64)
    # Output layer: (tb, 64) f32 @ (64, A) f32 -> f32 acc, +bias.
    o = jnp.dot(h, w2_ref[...], preferred_element_type=jnp.float32)
    out_ref[...] = (o + b2_ref[...]).astype(out_ref.dtype)   # (tb, A)


@functools.partial(jax.jit, static_argnames=("tile_b",))
def atlas_index_qnet_forward(x, w1, b1, w2, b2, *, tile_b: int = 1024):
    """x: (B, state_num) f32; w1: (S, 64); b1: (64,)/(1, 64);
    w2: (64, A); b2: (A,)/(1, A). Returns (B, action_num) f32."""
    B, S = x.shape
    H = w1.shape[1]
    A = w2.shape[1]
    b1 = b1.reshape(1, H).astype(jnp.float32)
    b2 = b2.reshape(1, A).astype(jnp.float32)

    # Batch tile: as large as possible (amortize per-step overhead), 8-aligned.
    tb = _round_up(B, 8) if B <= tile_b else tile_b
    n_tiles = _cdiv(B, tb)
    # Balance the grid across v7x's 2 TensorCores (harmless on v5e/v6e).
    if n_tiles > 1 and n_tiles % 2 == 1:
        tb = _round_up(_cdiv(B, n_tiles + 1), 8)
        n_tiles = _cdiv(B, tb)

    cost = pl.CostEstimate(
        flops=2 * B * (S * H + H * A),
        transcendentals=0,
        bytes_accessed=(B * S + B * A + S * H + H + H * A + A) * 4,
    )

    out = pl.pallas_call(
        qnet_kernel,
        out_shape=jax.ShapeDtypeStruct((B, A), jnp.float32),
        grid=(n_tiles,),
        in_specs=[
            pl.BlockSpec((tb, S), lambda i: (i, 0)),   # x: batch-tiled
            pl.BlockSpec((S, H), lambda i: (0, 0)),    # W1: VMEM-resident
            pl.BlockSpec((1, H), lambda i: (0, 0)),    # b1: VMEM-resident
            pl.BlockSpec((H, A), lambda i: (0, 0)),    # W2: VMEM-resident
            pl.BlockSpec((1, A), lambda i: (0, 0)),    # b2: VMEM-resident
        ],
        out_specs=pl.BlockSpec((tb, A), lambda i: (i, 0)),
        compiler_params=pltpu.CompilerParams(
            dimension_semantics=("parallel",),
        ),
        cost_estimate=cost,
    )(x.astype(jnp.float32), w1.astype(jnp.float32), b1,
      w2.astype(jnp.float32), b2)

    return out


def init_params(key, state_num, action_num, hidden=64):
    """PyTorch nn.Linear default init: U[-1/sqrt(fan_in), +1/sqrt(fan_in)]."""
    k1, k2, k3, k4 = jax.random.split(key, 4)
    lim1 = 1.0 / jnp.sqrt(jnp.float32(state_num))
    lim2 = 1.0 / jnp.sqrt(jnp.float32(hidden))
    w1 = jax.random.uniform(k1, (state_num, hidden), jnp.float32, -lim1, lim1)
    b1 = jax.random.uniform(k2, (1, hidden), jnp.float32, -lim1, lim1)
    w2 = jax.random.uniform(k3, (hidden, action_num), jnp.float32, -lim2, lim2)
    b2 = jax.random.uniform(k4, (1, action_num), jnp.float32, -lim2, lim2)
    return w1, b1, w2, b2


def _reference_f32(x, w1, b1, w2, b2):
    return jnp.maximum(x @ w1 + b1, 0.0) @ w2 + b2


if __name__ == "__main__":
    key = jax.random.PRNGKey(0)
    state_num = 32
    action_num = 16

    kx, kp, kx2 = jax.random.split(key, 3)
    w1, b1, w2, b2 = init_params(kp, state_num, action_num)

    # Small batch (single grid step, B not a multiple of 128 lanes anywhere).
    x_small = jax.random.normal(kx, (8, state_num), jnp.float32)
    out_small = jax.block_until_ready(
        atlas_index_qnet_forward(x_small, w1, b1, w2, b2))
    assert out_small.shape == (8, action_num)
    ref_small = _reference_f32(x_small, w1, b1, w2, b2)
    assert jnp.allclose(out_small, ref_small, atol=1e-2, rtol=1e-2)

    # Multi-tile grid with a non-divisible tail (200 rows, tile_b=64 -> 4 tiles,
    # last tile masked on store). Exercises boundary handling without padding.
    x_big = jax.random.normal(kx2, (200, state_num), jnp.float32)
    out_big = jax.block_until_ready(
        atlas_index_qnet_forward(x_big, w1, b1, w2, b2, tile_b=64))
    assert out_big.shape == (200, action_num)
    ref_big = _reference_f32(x_big, w1, b1, w2, b2)
    assert jnp.allclose(out_big, ref_big, atol=1e-2, rtol=1e-2)

    print("KERNEL_OK")
</pallas_src>

<mosaic_0001>
module attributes {stable_mosaic.version = 11 : i64} {
  func.func @qnet_kernel(%arg0: i32, %arg1: memref<8x32xf32, #tpu.memory_space<vmem>>, %arg2: memref<32x64xf32, #tpu.memory_space<vmem>>, %arg3: memref<1x64xf32, #tpu.memory_space<vmem>>, %arg4: memref<64x16xf32, #tpu.memory_space<vmem>>, %arg5: memref<1x16xf32, #tpu.memory_space<vmem>>, %arg6: memref<8x16xf32, #tpu.memory_space<vmem>>) attributes {dimension_semantics = [#tpu.dimension_semantics<parallel>], iteration_bounds = array<i64: 1>, scalar_prefetch = 0 : i64, scratch_operands = 0 : i64, tpu.core_type = #tpu.core_type<tc>, window_params = [{transform_indices = @transform_0, window_bounds = array<i64: 8, 32>}, {pipeline_mode = #tpu.pipeline_mode<synchronous>, transform_indices = @transform_1, window_bounds = array<i64: 32, 64>}, {pipeline_mode = #tpu.pipeline_mode<synchronous>, transform_indices = @transform_2, window_bounds = array<i64: 1, 64>}, {pipeline_mode = #tpu.pipeline_mode<synchronous>, transform_indices = @transform_3, window_bounds = array<i64: 64, 16>}, {pipeline_mode = #tpu.pipeline_mode<synchronous>, transform_indices = @transform_4, window_bounds = array<i64: 1, 16>}, {transform_indices = @transform_5, window_bounds = array<i64: 8, 16>}]} {
    %c0 = arith.constant 0 : index
    %c0_0 = arith.constant 0 : index
    %0 = vector.load %arg1[%c0, %c0_0] : memref<8x32xf32, #tpu.memory_space<vmem>>, vector<8x32xf32>
    %c0_1 = arith.constant 0 : index
    %c0_2 = arith.constant 0 : index
    %1 = vector.load %arg2[%c0_1, %c0_2] : memref<32x64xf32, #tpu.memory_space<vmem>>, vector<32x64xf32>
    %cst = arith.constant dense<0.000000e+00> : vector<8x64xf32>
    %2 = tpu.matmul %0, %1, %cst {dimension_numbers = #tpu.dot_dimension_numbers<[1], [0], [0], [1], [0, 0, 1, 1], [], []>} : vector<8x32xf32>, vector<32x64xf32>, vector<8x64xf32> -> vector<8x64xf32>
    %c0_3 = arith.constant 0 : index
    %c0_4 = arith.constant 0 : index
    %3 = vector.load %arg3[%c0_3, %c0_4] : memref<1x64xf32, #tpu.memory_space<vmem>>, vector<1x64xf32>
    %4 = vector.broadcast %3 : vector<1x64xf32> to vector<8x64xf32>
    %5 = arith.addf %2, %4 : vector<8x64xf32>
    %cst_5 = arith.constant 0.000000e+00 : f32
    %6 = vector.broadcast %cst_5 : f32 to vector<8x64xf32>
    %7 = arith.maximumf %5, %6 : vector<8x64xf32>
    %c0_6 = arith.constant 0 : index
    %c0_7 = arith.constant 0 : index
    %8 = vector.load %arg4[%c0_6, %c0_7] : memref<64x16xf32, #tpu.memory_space<vmem>>, vector<64x16xf32>
    %cst_8 = arith.constant dense<0.000000e+00> : vector<8x16xf32>
    %9 = tpu.matmul %7, %8, %cst_8 {dimension_numbers = #tpu.dot_dimension_numbers<[1], [0], [0], [1], [0, 0, 1, 1], [], []>} : vector<8x64xf32>, vector<64x16xf32>, vector<8x16xf32> -> vector<8x16xf32>
    %c0_9 = arith.constant 0 : index
    %c0_10 = arith.constant 0 : index
    %10 = vector.load %arg5[%c0_9, %c0_10] : memref<1x16xf32, #tpu.memory_space<vmem>>, vector<1x16xf32>
    %11 = vector.broadcast %10 : vector<1x16xf32> to vector<8x16xf32>
    %12 = arith.addf %9, %11 : vector<8x16xf32>
    %c0_11 = arith.constant 0 : index
    %c0_12 = arith.constant 0 : index
    %13 = vector.load %arg6[%c0_11, %c0_12] : memref<8x16xf32, #tpu.memory_space<vmem>>, vector<8x16xf32>
    tpu.vector_store %arg6[%c0_11, %c0_12], %12 {strides = array<i32>} : memref<8x16xf32, #tpu.memory_space<vmem>>, vector<8x16xf32>,
    return
  }
  func.func @transform_0(%arg0: i32) -> (i32, i32) {
    %c0_i32 = arith.constant 0 : i32
    %c0_i32_0 = arith.constant 0 : i32
    return %arg0, %c0_i32 : i32, i32
  }
  func.func @transform_1(%arg0: i32) -> (i32, i32) {
    %c0_i32 = arith.constant 0 : i32
    %c0_i32_0 = arith.constant 0 : i32
    %c0_i32_1 = arith.constant 0 : i32
    return %c0_i32, %c0_i32_0 : i32, i32
  }
  func.func @transform_2(%arg0: i32) -> (i32, i32) {
    %c0_i32 = arith.constant 0 : i32
    %c0_i32_0 = arith.constant 0 : i32
    %c0_i32_1 = arith.constant 0 : i32
    return %c0_i32, %c0_i32_0 : i32, i32
  }
  func.func @transform_3(%arg0: i32) -> (i32, i32) {
    %c0_i32 = arith.constant 0 : i32
    %c0_i32_0 = arith.constant 0 : i32
    %c0_i32_1 = arith.constant 0 : i32
    return %c0_i32, %c0_i32_0 : i32, i32
  }
  func.func @transform_4(%arg0: i32) -> (i32, i32) {
    %c0_i32 = arith.constant 0 : i32
    %c0_i32_0 = arith.constant 0 : i32
    %c0_i32_1 = arith.constant 0 : i32
    return %c0_i32, %c0_i32_0 : i32, i32
  }
  func.func @transform_5(%arg0: i32) -> (i32, i32) {
    %c0_i32 = arith.constant 0 : i32
    %c0_i32_0 = arith.constant 0 : i32
    return %arg0, %c0_i32 : i32, i32
  }
}

</mosaic_0001>

<llo_original>
// kernel: atlas_index_qnet_forward.1
$region0: #{atlas_index_qnet_forward.1}
  #allocation0 [shape = 'u32[]', space=smem, size = 0x4, offset = 0x4, fixed_abs, tag = 'smem constant byte address 0x4 - core index']
  #allocation1 [shape = 'u32[144,128]{1,0:T(1,128)}', space=vmem, size = 0x12000, scoped, tag = 'internal scratch']
  %s0 = inlined_call_operand.vmem [shape: f32[8,32], index: 0, kind: input, shape index: {}]
  %s1 = inlined_call_operand.vmem [shape: f32[32,64], index: 1, kind: input, shape index: {}]
  %s2 = inlined_call_operand.vmem [shape: f32[1,64], index: 2, kind: input, shape index: {}]
  %s3 = inlined_call_operand.vmem [shape: f32[64,16], index: 3, kind: input, shape index: {}]
  %s4 = inlined_call_operand.vmem [shape: f32[1,16], index: 4, kind: input, shape index: {}]
  %s5 = inlined_call_operand.hbm [shape: f32[8,16], index: 5, kind: output, shape index: {}]
  %s6 = sld [smem:[#allocation0]]
  $region30: #{atlas_index_qnet_forward.1} parent=0
    _
  %s8 = ssub.s32 1, %s6
  %s9 = scalar_select 0, %s8, %s6
  $region1: #{atlas_index_qnet_forward.1} parent=0
    #allocation2 [shape = 'u8[4096]{0}', space=vmem, size = 0x1000, scoped, tag = 'output window, operand 0, single buffered']
    #allocation3 [shape = 's32[1]{0}', space=sflag, size = 0x4, scoped, tag = 'scoped memory for atlas_index_qnet_forward.1']
    %10 = vsyncpa [#allocation3], 0
    // Predicated region
    $region2: #{atlas_index_qnet_forward.1} parent=1 // pred_check
      _
    $region3: #{atlas_index_qnet_forward.1} parent=1 // pred_check_branch
      %12 = sbr.rel (0) target = $region5
    $region4: #{atlas_index_qnet_forward.1} parent=1 // pred_region
      _
    $region5: #{atlas_index_qnet_forward.1} parent=1 // pred_fallthru
      _
    // Predicated region
    $region6: #{atlas_index_qnet_forward.1} parent=1 // pred_check
      _
    $region7: #{atlas_index_qnet_forward.1} parent=1 // pred_check_branch
      %14 = sbr.rel (0) target = $region9
    $region8: #{atlas_index_qnet_forward.1} parent=1 // pred_region
      _
    $region9: #{atlas_index_qnet_forward.1} parent=1 // pred_fallthru
      _
    // Predicated region
    $region10: #{atlas_index_qnet_forward.1} parent=1 // pred_check
      _
    $region11: #{atlas_index_qnet_forward.1} parent=1 // pred_check_branch
      %16 = sbr.rel (0) target = $region13
    $region12: #{atlas_index_qnet_forward.1} parent=1 // pred_region
      _
    $region13: #{atlas_index_qnet_forward.1} parent=1 // pred_fallthru
      _
    // Predicated region
    $region14: #{atlas_index_qnet_forward.1} parent=1 // pred_check
      _
    $region15: #{atlas_index_qnet_forward.1} parent=1 // pred_check_branch
      %18 = sbr.rel (0) target = $region17
    $region16: #{atlas_index_qnet_forward.1} parent=1 // pred_region
      _
    $region17: #{atlas_index_qnet_forward.1} parent=1 // pred_fallthru
      _
    // Predicated region
    $region18: #{atlas_index_qnet_forward.1} parent=1 // pred_check
      _
    $region19: #{atlas_index_qnet_forward.1} parent=1 // pred_check_branch
      %20 = sbr.rel (0) target = $region21
    $region20: #{atlas_index_qnet_forward.1} parent=1 // pred_region
      _
    $region21: #{atlas_index_qnet_forward.1} parent=1 // pred_fallthru
      _
    %v21 = vld [vmem:[%s0] sm:$0xff]
    %v22 = vld [vmem:[%s1] sm:$0xff]
    %v23 = vld [vmem:[%s1 + $0x8] sm:$0xff]
    %v24 = vld [vmem:[%s1 + $0x10] sm:$0xff]
    %v25 = vld [vmem:[%s1 + $0x18] sm:$0xff]
    %v26 = vld [vmem:[%s2] sm:$0x1]
    %v28 = vlaneseq
    %v29 = vshrl.u32 %v28, 7
    %v30 = vsub.s32 0, %v29
    %v31 = vrot.slane %v26, %v30
    %vm33 = vcmask 261120
    %v35 = vsel %vm33, %v21, 0
    %37 = vmatprep.subr.mxu0 0.0
    %38 = vmatpush1.msra.mxu0 %v22
    %39 = vmatprep.subr.mxu0 0.0
    %40 = vmatpush1.msra.mxu0 %v23
    %41 = vmatprep.subr.mxu0 0.0
    %42 = vmatpush1.msra.mxu0 %v24
    %43 = vmatprep.subr.mxu0 0.0
    %44 = vmatpush1.msra.mxu0 %v25
    %45 = vmatprep.subr.mxu0 0.0
    %46 = vmatpush1.msra.mxu0 0.0
    %47 = vmatprep.subr.mxu0 0.0
    %48 = vmatpush1.msra.mxu0 0.0
    %49 = vmatprep.subr.mxu0 0.0
    %50 = vmatpush1.msra.mxu0 0.0
    %51 = vmatprep.subr.mxu0 0.0
    %52 = vmatpush1.msra.mxu0 0.0
    %53 = vmatprep.subr.mxu0 0.0
    %54 = vmatpush1.msra.mxu0 0.0
    %55 = vmatprep.subr.mxu0 0.0
    %56 = vmatpush1.msra.mxu0 0.0
    %57 = vmatprep.subr.mxu0 0.0
    %58 = vmatpush1.msra.mxu0 0.0
    %59 = vmatprep.subr.mxu0 0.0
    %60 = vmatpush1.msra.mxu0 0.0
    %61 = vmatprep.subr.mxu0 0.0
    %62 = vmatpush1.msra.mxu0 0.0
    %63 = vmatprep.subr.mxu0 0.0
    %64 = vmatpush1.msra.mxu0 0.0
    %65 = vmatprep.subr.mxu0 0.0
    %66 = vmatpush1.msra.mxu0 0.0
    %67 = vmatprep.subr.mxu0 0.0
    %68 = vmatpush1.msra.mxu0 0.0
    %69 = vmatprep.subr.mxu0 0.0
    %70 = vmatpush1.msra.mxu0 0.0
    %71 = vmatprep.subr.mxu0 0.0
    %72 = vmatpush1.msra.mxu0 0.0
    %73 = vmatprep.subr.mxu0 0.0
    %74 = vmatpush1.msra.mxu0 0.0
    %75 = vmatprep.subr.mxu0 0.0
    %76 = vmatpush1.msra.mxu0 0.0
    %77 = vmatprep.subr.mxu0 0.0
    %78 = vmatpush1.msra.mxu0 0.0
    %79 = vmatprep.subr.mxu0 0.0
    %80 = vmatpush1.msra.mxu0 0.0
    %81 = vmatprep.subr.mxu0 0.0
    %82 = vmatpush1.msra.mxu0 0.0
    %83 = vmatprep.subr.mxu0 0.0
    %84 = vmatpush1.msra.mxu0 0.0
    %85 = vmatprep.subr.mxu0 0.0
    %86 = vmatpush1.msra.mxu0 0.0
    %87 = vmatprep.subr.mxu0 0.0
    %88 = vmatpush1.msra.mxu0 0.0
    %89 = vmatprep.subr.mxu0 0.0
    %90 = vmatpush1.msra.mxu0 0.0
    %91 = vmatprep.subr.mxu0 0.0
    %92 = vmatpush1.msra.mxu0 0.0
    %93 = vmatprep.subr.mxu0 0.0
    %94 = vmatpush1.msra.mxu0 0.0
    %95 = vmatprep.subr.mxu0 0.0
    %96 = vmatpush1.msra.mxu0 0.0
    %97 = vmatprep.subr.mxu0 0.0
    %98 = vmatpush1.msra.mxu0 0.0
    %99 = vmatprep.subr.mxu0 0.0
    %100 = vmatpush1.msra.mxu0 0.0
    %101 = vmatprep.mubr.f32.mxu0 0.0
    %102 = vmatmul.mubr.f32.gmra.mrb[0].mxu0 %v35
    %v103 = vpop.f32.mrb[0].mxu0
    %v104 = vadd.f32 %v31, %v103
    %v105 = vpop.f32.mrb[0].mxu0
    %106 = vdwg.mxu0
    %v107 = vmax.f32 %v104, 0.0
    %v108 = vld [vmem:[%s3] sm:$0xff]
    %v109 = vld [vmem:[%s3 + $0x8] sm:$0xff]
    %v110 = vld [vmem:[%s3 + $0x10] sm:$0xff]
    %v111 = vld [vmem:[%s3 + $0x18] sm:$0xff]
    %v112 = vld [vmem:[%s3 + $0x20] sm:$0xff]
    %v113 = vld [vmem:[%s3 + $0x28] sm:$0xff]
    %v114 = vld [vmem:[%s3 + $0x30] sm:$0xff]
    %v115 = vld [vmem:[%s3 + $0x38] sm:$0xff]
    %v116 = vld [vmem:[%s4] sm:$0x1]
    %v118 = vlaneseq
    %v119 = vshrl.u32 %v118, 7
    %v120 = vsub.s32 0, %v119
    %v121 = vrot.slane %v116, %v120
    %vm123 = vcmask 523264
    %v125 = vsel %vm123, %v107, 0
    %127 = vmatprep.subr.mxu0 0.0
    %128 = vmatpush1.msra.mxu0 %v108
    %129 = vmatprep.subr.mxu0 0.0
    %130 = vmatpush1.msra.mxu0 %v109
    %131 = vmatprep.subr.mxu0 0.0
    %132 = vmatpush1.msra.mxu0 %v110
    %133 = vmatprep.subr.mxu0 0.0
    %134 = vmatpush1.msra.mxu0 %v111
    %135 = vmatprep.subr.mxu0 0.0
    %136 = vmatpush1.msra.mxu0 %v112
    %137 = vmatprep.subr.mxu0 0.0
    %138 = vmatpush1.msra.mxu0 %v113
    %139 = vmatprep.subr.mxu0 0.0
    %140 = vmatpush1.msra.mxu0 %v114
    %141 = vmatprep.subr.mxu0 0.0
    %142 = vmatpush1.msra.mxu0 %v115
    %143 = vmatprep.subr.mxu0 0.0
    %144 = vmatpush1.msra.mxu0 0.0
    %145 = vmatprep.subr.mxu0 0.0
    %146 = vmatpush1.msra.mxu0 0.0
    %147 = vmatprep.subr.mxu0 0.0
    %148 = vmatpush1.msra.mxu0 0.0
    %149 = vmatprep.subr.mxu0 0.0
    %150 = vmatpush1.msra.mxu0 0.0
    %151 = vmatprep.subr.mxu0 0.0
    %152 = vmatpush1.msra.mxu0 0.0
    %153 = vmatprep.subr.mxu0 0.0
    %154 = vmatpush1.msra.mxu0 0.0
    %155 = vmatprep.subr.mxu0 0.0
    %156 = vmatpush1.msra.mxu0 0.0
    %157 = vmatprep.subr.mxu0 0.0
    %158 = vmatpush1.msra.mxu0 0.0
    %159 = vmatprep.subr.mxu0 0.0
    %160 = vmatpush1.msra.mxu0 0.0
    %161 = vmatprep.subr.mxu0 0.0
    %162 = vmatpush1.msra.mxu0 0.0
    %163 = vmatprep.subr.mxu0 0.0
    %164 = vmatpush1.msra.mxu0 0.0
    %165 = vmatprep.subr.mxu0 0.0
    %166 = vmatpush1.msra.mxu0 0.0
    %167 = vmatprep.subr.mxu0 0.0
    %168 = vmatpush1.msra.mxu0 0.0
    %169 = vmatprep.subr.mxu0 0.0
    %170 = vmatpush1.msra.mxu0 0.0
    %171 = vmatprep.subr.mxu0 0.0
    %172 = vmatpush1.msra.mxu0 0.0
    %173 = vmatprep.subr.mxu0 0.0
    %174 = vmatpush1.msra.mxu0 0.0
    %175 = vmatprep.subr.mxu0 0.0
    %176 = vmatpush1.msra.mxu0 0.0
    %177 = vmatprep.subr.mxu0 0.0
    %178 = vmatpush1.msra.mxu0 0.0
    %179 = vmatprep.subr.mxu0 0.0
    %180 = vmatpush1.msra.mxu0 0.0
    %181 = vmatprep.subr.mxu0 0.0
    %182 = vmatpush1.msra.mxu0 0.0
    %183 = vmatprep.subr.mxu0 0.0
    %184 = vmatpush1.msra.mxu0 0.0
    %185 = vmatprep.subr.mxu0 0.0
    %186 = vmatpush1.msra.mxu0 0.0
    %187 = vmatprep.subr.mxu0 0.0
    %188 = vmatpush1.msra.mxu0 0.0
    %189 = vmatprep.subr.mxu0 0.0
    %190 = vmatpush1.msra.mxu0 0.0
    %191 = vmatprep.mubr.f32.mxu0 0.0
    %192 = vmatmul.mubr.f32.gmra.mrb[0].mxu0 %v125
    %v193 = vpop.f32.mrb[0].mxu0
    %v194 = vadd.f32 %v121, %v193
    %v195 = vpop.f32.mrb[0].mxu0
    %196 = vdwg.mxu0
    %vm197 = vcmask 130048
    %198 = vst.msk [vmem:[#allocation2] sm:$0xff] %vm197, %v194
    // Predicated region
    $region22: #{atlas_index_qnet_forward.1} parent=1 // pred_check
      _
    $region23: #{atlas_index_qnet_forward.1} parent=1 // pred_check_branch
      %200 = sbr.rel (0) target = $region25
    $region24: #{atlas_index_qnet_forward.1} parent=1 // pred_region
      %s202 = ssub.s32 128, 128
      %203 = vsyncadd [#allocation3], %s202
      %s205 = sshll.u32 [#allocation2], 4
      %s206 = int_to_ptr.vmem [resolvable:$true] %s205
      %208 = dma.vmem_to_hbm [thread:$0]  %s206, 128, %s5, [#allocation3]
    $region25: #{atlas_index_qnet_forward.1} parent=1 // pred_fallthru
      _
    // Predicated region
    $region26: #{atlas_index_qnet_forward.1} parent=1 // pred_check
      _
    $region27: #{atlas_index_qnet_forward.1} parent=1 // pred_check_branch
      %210 = sbr.rel (0) target = $region29
    $region28: #{atlas_index_qnet_forward.1} parent=1 // pred_region
      %211 = dma.done [#allocation3], 128
    $region29: #{atlas_index_qnet_forward.1} parent=1 // pred_fallthru
      _
    %212 = vsyncpa [#allocation3], 1

</llo_original>
